<compile_context>
chip_gen: v7x
topology: tpu7x:2x2x1
jax: 0.10.0
libtpu: 0.0.40
codegen_flags: <defaults>
</compile_context>

<pallas_src>
import jax
import jax.numpy as jnp
from jax.experimental import pallas as pl
from jax.experimental.pallas import tpu as pltpu


def cross_attention_kernel(c_ref, w_ref, b_ref, o_ref):
    """One batch tile: out = cond @ W_fused + bp  (f32 accumulate, f32 bias add)."""
    c = c_ref[...].astype(w_ref.dtype)          # in-kernel cast (VPU), hidden under DMA
    out = jnp.dot(c, w_ref[...], preferred_element_type=jnp.float32)
    o_ref[...] = (out + b_ref[...]).astype(o_ref.dtype)


def _round_up(v, m):
    return ((v + m - 1) // m) * m


def cross_attention(x, cond, wk, wq, wv, wp, bp, *,
                    block_b=None, use_bf16=False, out_dtype=None):
    """Pallas CrossAttention forward.

    x:  (B, x_dim)       cond: (B, cond_dim)
    wk: (x_dim, A)       wq:   (cond_dim, A)   [interface parity only; mathematically
                                                 dead -> unused]
    wv: (cond_dim, A)    wp:   (A, x_dim)      bp: (x_dim,)
    """
    del wk, wq  # softmax over a length-1 axis == 1.0 -> output independent of x/Wk/Wq

    B, x_dim = x.shape
    cond_dim = cond.shape[1]
    if out_dtype is None:
        out_dtype = x.dtype
    out_itemsize = jnp.dtype(out_dtype).itemsize

    # ---- fuse the two matmuls: W_fused = Wv @ Wp (tiny, one-time / constant-folded) ----
    w_fused = jnp.dot(wv.astype(jnp.float32), wp.astype(jnp.float32),
                      preferred_element_type=jnp.float32)        # (cond_dim, x_dim)
    bias = bp.astype(jnp.float32)

    # ---- lane padding only when it is cheap relative to the output stream ----
    # x_dim <= 128: block's last dim == full array dim (allowed), no padded writes.
    xp = x_dim if x_dim <= 128 else _round_up(x_dim, 128)
    if xp != x_dim:
        w_fused = jnp.pad(w_fused, ((0, 0), (0, xp - x_dim)))
        bias = jnp.pad(bias, ((0, xp - x_dim),))
    bias2 = bias.reshape(1, xp)

    # ---- weight dtype: bf16 weights halve weight DMA; cond stays f32 in HBM ----
    w_dtype = jnp.bfloat16 if use_bf16 else jnp.float32
    w_fused = w_fused.astype(w_dtype)
    w_itemsize = jnp.dtype(w_dtype).itemsize
    cond_itemsize = jnp.dtype(cond.dtype).itemsize

    # ---- batch tile: big (amortize ~0.35us/step), aligned, >=2 blocks when possible ----
    align = 16 if use_bf16 else 8               # packed bf16 rows: 16-aligned sublanes
    cap = block_b if block_b is not None else (2048 if use_bf16 else 1024)
    cap = max(align, (int(cap) // align) * align)
    if B >= 2 * align:
        tb = min(_round_up(pl.cdiv(B, 2), align), cap)   # >=2 grid blocks (v7x dual-TC)
    else:
        tb = align
    tb = max(align, (tb // align) * align)

    # ---- VMEM budget (v7x: 64 MiB physical); shrink tb if needed ----
    def tile_bytes(t):
        return (2 * t * cond_dim * cond_itemsize      # cond, double-buffered
                + cond_dim * xp * w_itemsize          # fused weight, single-buffered
                + xp * 4                              # bias, single-buffered
                + 2 * t * xp * out_itemsize)          # output, double-buffered
    budget = 48 << 20
    while tb > align and tile_bytes(tb) > budget:
        tb = max(align, ((tb // 2) // align) * align)
    vmem_limit = int(min(max(2 * tile_bytes(tb), 4 << 20), 64 << 20))

    n_blocks = pl.cdiv(B, tb)
    Bp = n_blocks * tb
    cond_in = cond if Bp == B else jnp.pad(cond, ((0, Bp - B), (0, 0)))

    flops = 2 * Bp * cond_dim * xp
    bytes_accessed = (Bp * cond_dim * cond_itemsize
                      + cond_dim * xp * w_itemsize
                      + xp * 4
                      + Bp * xp * out_itemsize)

    out = pl.pallas_call(
        cross_attention_kernel,
        out_shape=jax.ShapeDtypeStruct((Bp, xp), out_dtype),
        grid=(n_blocks,),
        in_specs=[
            pl.BlockSpec((tb, cond_dim), lambda i: (i, 0)),            # cond: batch-tiled
            pl.BlockSpec((cond_dim, xp), lambda i: (0, 0),
                         pipeline_mode=pl.Buffered(1)),                # fused weight
            pl.BlockSpec((1, xp), lambda i: (0, 0),
                         pipeline_mode=pl.Buffered(1)),                # bias
        ],
        out_specs=pl.BlockSpec((tb, xp), lambda i: (i, 0)),
        compiler_params=pltpu.CompilerParams(
            dimension_semantics=("parallel",),
            vmem_limit_bytes=vmem_limit),
        cost_estimate=pl.CostEstimate(
            flops=flops, transcendentals=0, bytes_accessed=bytes_accessed),
    )(cond_in, w_fused, bias2)

    if Bp == B and xp == x_dim:
        return out
    return out[:B, :x_dim]


def cross_attention_ref(x, cond, wk, wq, wv, wp, bp):
    """Pure-JAX reference mirroring the PyTorch forward (incl. the length-1 softmax)."""
    A = wk.shape[1]
    K = x @ wk
    Q = cond @ wq
    V = cond @ wv
    scores = jnp.sum(Q * K, axis=-1, keepdims=True) / jnp.sqrt(jnp.float32(A))
    w = jax.nn.softmax(scores, axis=-1)   # length-1 axis -> exactly 1.0
    attended = w * V
    return attended @ wp + bp


if __name__ == "__main__":
    B, x_dim, cond_dim, attn_dim = 8, 32, 16, 128

    key = jax.random.PRNGKey(0)
    kx, kc, k1, k2, k3, k4, k5 = jax.random.split(key, 7)

    x = jax.random.normal(kx, (B, x_dim), dtype=jnp.float32)
    cond = jax.random.normal(kc, (B, cond_dim), dtype=jnp.float32)

    # Parameters stored as (in_features, out_features); PyTorch stores (out, in).
    wk = jax.random.normal(k1, (x_dim, attn_dim), dtype=jnp.float32) * 0.05
    wq = jax.random.normal(k2, (cond_dim, attn_dim), dtype=jnp.float32) * 0.05
    wv = jax.random.normal(k3, (cond_dim, attn_dim), dtype=jnp.float32) * 0.05
    wp = jax.random.normal(k4, (attn_dim, x_dim), dtype=jnp.float32) * 0.05
    bp = jax.random.normal(k5, (x_dim,), dtype=jnp.float32) * 0.05

    ref = cross_attention_ref(x, cond, wk, wq, wv, wp, bp)

    # f32 path (default): Wv@Wp fused, so not bit-exact with the two-matmul form,
    # but well within normal f32 tolerance.
    out = jax.block_until_ready(cross_attention(x, cond, wk, wq, wv, wp, bp))
    assert out.shape == (B, x_dim)
    assert jnp.allclose(out, ref, atol=1e-4, rtol=1e-4)

    # bf16 MXU-operand path (recommended default on v6e/v7x); looser tolerance.
    out_bf16 = jax.block_until_ready(
        cross_attention(x, cond, wk, wq, wv, wp, bp, use_bf16=True))
    assert out_bf16.shape == (B, x_dim)
    assert jnp.allclose(out_bf16, ref, atol=1e-2, rtol=1e-2)

    print("KERNEL_OK")
</pallas_src>

<mosaic_0001>
module attributes {stable_mosaic.version = 11 : i64} {
  func.func @cross_attention_kernel(%arg0: i32, %arg1: memref<8x16xf32, #tpu.memory_space<vmem>>, %arg2: memref<16x32xf32, #tpu.memory_space<vmem>>, %arg3: memref<1x32xf32, #tpu.memory_space<vmem>>, %arg4: memref<8x32xf32, #tpu.memory_space<vmem>>) attributes {dimension_semantics = [#tpu.dimension_semantics<parallel>], iteration_bounds = array<i64: 1>, scalar_prefetch = 0 : i64, scratch_operands = 0 : i64, tpu.core_type = #tpu.core_type<tc>, window_params = [{transform_indices = @transform_0, window_bounds = array<i64: 8, 16>}, {pipeline_mode = #tpu.pipeline_mode<synchronous>, transform_indices = @transform_1, window_bounds = array<i64: 16, 32>}, {pipeline_mode = #tpu.pipeline_mode<synchronous>, transform_indices = @transform_2, window_bounds = array<i64: 1, 32>}, {transform_indices = @transform_3, window_bounds = array<i64: 8, 32>}]} {
    %c0 = arith.constant 0 : index
    %c0_0 = arith.constant 0 : index
    %0 = vector.load %arg1[%c0, %c0_0] : memref<8x16xf32, #tpu.memory_space<vmem>>, vector<8x16xf32>
    %c0_1 = arith.constant 0 : index
    %c0_2 = arith.constant 0 : index
    %1 = vector.load %arg2[%c0_1, %c0_2] : memref<16x32xf32, #tpu.memory_space<vmem>>, vector<16x32xf32>
    %cst = arith.constant dense<0.000000e+00> : vector<8x32xf32>
    %2 = tpu.matmul %0, %1, %cst {dimension_numbers = #tpu.dot_dimension_numbers<[1], [0], [0], [1], [0, 0, 1, 1], [], []>} : vector<8x16xf32>, vector<16x32xf32>, vector<8x32xf32> -> vector<8x32xf32>
    %c0_3 = arith.constant 0 : index
    %c0_4 = arith.constant 0 : index
    %3 = vector.load %arg3[%c0_3, %c0_4] : memref<1x32xf32, #tpu.memory_space<vmem>>, vector<1x32xf32>
    %4 = vector.broadcast %3 : vector<1x32xf32> to vector<8x32xf32>
    %5 = arith.addf %2, %4 : vector<8x32xf32>
    %c0_5 = arith.constant 0 : index
    %c0_6 = arith.constant 0 : index
    %6 = vector.load %arg4[%c0_5, %c0_6] : memref<8x32xf32, #tpu.memory_space<vmem>>, vector<8x32xf32>
    tpu.vector_store %arg4[%c0_5, %c0_6], %5 {strides = array<i32>} : memref<8x32xf32, #tpu.memory_space<vmem>>, vector<8x32xf32>,
    return
  }
  func.func @transform_0(%arg0: i32) -> (i32, i32) {
    %c0_i32 = arith.constant 0 : i32
    %c0_i32_0 = arith.constant 0 : i32
    return %arg0, %c0_i32 : i32, i32
  }
  func.func @transform_1(%arg0: i32) -> (i32, i32) {
    %c0_i32 = arith.constant 0 : i32
    %c0_i32_0 = arith.constant 0 : i32
    %c0_i32_1 = arith.constant 0 : i32
    return %c0_i32, %c0_i32_0 : i32, i32
  }
  func.func @transform_2(%arg0: i32) -> (i32, i32) {
    %c0_i32 = arith.constant 0 : i32
    %c0_i32_0 = arith.constant 0 : i32
    %c0_i32_1 = arith.constant 0 : i32
    return %c0_i32, %c0_i32_0 : i32, i32
  }
  func.func @transform_3(%arg0: i32) -> (i32, i32) {
    %c0_i32 = arith.constant 0 : i32
    %c0_i32_0 = arith.constant 0 : i32
    return %arg0, %c0_i32 : i32, i32
  }
}

</mosaic_0001>

<llo_original>
// kernel: tpu_custom_call.1
$region0: #{tpu_custom_call.1}
  #allocation0 [shape = 'u32[]', space=smem, size = 0x4, offset = 0x4, fixed_abs, tag = 'smem constant byte address 0x4 - core index']
  #allocation1 [shape = 'u32[144,128]{1,0:T(1,128)}', space=vmem, size = 0x12000, scoped, tag = 'internal scratch']
  %s0 = inlined_call_operand.hbm [shape: f32[8,16], index: 0, kind: input, shape index: {}]
  %s1 = inlined_call_operand.hbm [shape: f32[16,32], index: 1, kind: input, shape index: {}]
  %s2 = inlined_call_operand.vmem [shape: f32[1,32], index: 2, kind: input, shape index: {}]
  %s3 = inlined_call_operand.hbm [shape: f32[8,32], index: 3, kind: output, shape index: {}]
  %s4 = sld [smem:[#allocation0]]
  $region30: #{tpu_custom_call.1} parent=0
    _
  %s6 = ssub.s32 1, %s4
  %s7 = scalar_select 0, %s6, %s4
  $region1: #{tpu_custom_call.1} parent=0
    #allocation2 [shape = 'u8[4096]{0}', space=vmem, size = 0x1000, scoped, tag = 'input window, operand 0, single buffered']
    #allocation3 [shape = 's32[1]{0}', space=sflag, size = 0x4, scoped, tag = 'scoped memory for tpu_custom_call.1']
    #allocation4 [shape = 's32[1]{0}', space=sflag, size = 0x4, scoped, tag = 'scoped memory for tpu_custom_call.1']
    #allocation5 [shape = 'u8[8192]{0}', space=vmem, size = 0x2000, scoped, tag = 'input window, operand 1, single buffered']
    #allocation6 [shape = 's32[1]{0}', space=sflag, size = 0x4, scoped, tag = 'scoped memory for tpu_custom_call.1']
    #allocation7 [shape = 'u8[4096]{0}', space=vmem, size = 0x1000, scoped, tag = 'output window, operand 0, single buffered']
    %8 = vsyncpa [#allocation3], 0
    %9 = vsyncpa [#allocation6], 0
    %10 = vsyncpa [#allocation4], 0
    // Predicated region
    $region2: #{tpu_custom_call.1} parent=1 // pred_check
      _
    $region3: #{tpu_custom_call.1} parent=1 // pred_check_branch
      %12 = sbr.rel (0) target = $region5
    $region4: #{tpu_custom_call.1} parent=1 // pred_region
      %s14 = ssub.s32 128, 128
      %15 = vsyncadd [#allocation3], %s14
      %s17 = sshll.u32 [#allocation2], 4
      %s18 = int_to_ptr.vmem [resolvable:$true] %s17
      %20 = dma.hbm_to_vmem [thread:$0]  %s0, 128, %s18, [#allocation3]
    $region5: #{tpu_custom_call.1} parent=1 // pred_fallthru
      _
    // Predicated region
    $region6: #{tpu_custom_call.1} parent=1 // pred_check
      _
    $region7: #{tpu_custom_call.1} parent=1 // pred_check_branch
      %22 = sbr.rel (0) target = $region9
    $region8: #{tpu_custom_call.1} parent=1 // pred_region
      %s24 = ssub.s32 256, 256
      %25 = vsyncadd [#allocation6], %s24
      %s26 = sshll.u32 [#allocation5], 4
      %s27 = int_to_ptr.vmem [resolvable:$true] %s26
      %32 = dma.hbm_to_vmem [thread:$0]  %s1, 256, %s27, [#allocation6], 128, 128, 8
    $region9: #{tpu_custom_call.1} parent=1 // pred_fallthru
      _
    // Predicated region
    $region10: #{tpu_custom_call.1} parent=1 // pred_check
      _
    $region11: #{tpu_custom_call.1} parent=1 // pred_check_branch
      %34 = sbr.rel (0) target = $region13
    $region12: #{tpu_custom_call.1} parent=1 // pred_region
      _
    $region13: #{tpu_custom_call.1} parent=1 // pred_fallthru
      _
    // Predicated region
    $region14: #{tpu_custom_call.1} parent=1 // pred_check
      _
    $region15: #{tpu_custom_call.1} parent=1 // pred_check_branch
      %36 = sbr.rel (0) target = $region17
    $region16: #{tpu_custom_call.1} parent=1 // pred_region
      %37 = dma.done [#allocation3], 128
    $region17: #{tpu_custom_call.1} parent=1 // pred_fallthru
      _
    // Predicated region
    $region18: #{tpu_custom_call.1} parent=1 // pred_check
      _
    $region19: #{tpu_custom_call.1} parent=1 // pred_check_branch
      %39 = sbr.rel (0) target = $region21
    $region20: #{tpu_custom_call.1} parent=1 // pred_region
      %40 = dma.done [#allocation6], 256
    $region21: #{tpu_custom_call.1} parent=1 // pred_fallthru
      _
    %v41 = vld [vmem:[#allocation2] sm:$0xff]
    %v42 = vld [vmem:[#allocation5] sm:$0xff]
    %v43 = vld [vmem:[#allocation5 + $0x8] sm:$0xff]
    %v44 = vld [vmem:[%s2] sm:$0x1]
    %v46 = vlaneseq
    %v47 = vshrl.u32 %v46, 7
    %v48 = vsub.s32 0, %v47
    %v49 = vrot.slane %v44, %v48
    %vm51 = vcmask 130048
    %v53 = vsel %vm51, %v41, 0
    %55 = vmatprep.subr.mxu0 0.0
    %56 = vmatpush1.msra.mxu0 %v42
    %57 = vmatprep.subr.mxu0 0.0
    %58 = vmatpush1.msra.mxu0 %v43
    %59 = vmatprep.subr.mxu0 0.0
    %60 = vmatpush1.msra.mxu0 0.0
    %61 = vmatprep.subr.mxu0 0.0
    %62 = vmatpush1.msra.mxu0 0.0
    %63 = vmatprep.subr.mxu0 0.0
    %64 = vmatpush1.msra.mxu0 0.0
    %65 = vmatprep.subr.mxu0 0.0
    %66 = vmatpush1.msra.mxu0 0.0
    %67 = vmatprep.subr.mxu0 0.0
    %68 = vmatpush1.msra.mxu0 0.0
    %69 = vmatprep.subr.mxu0 0.0
    %70 = vmatpush1.msra.mxu0 0.0
    %71 = vmatprep.subr.mxu0 0.0
    %72 = vmatpush1.msra.mxu0 0.0
    %73 = vmatprep.subr.mxu0 0.0
    %74 = vmatpush1.msra.mxu0 0.0
    %75 = vmatprep.subr.mxu0 0.0
    %76 = vmatpush1.msra.mxu0 0.0
    %77 = vmatprep.subr.mxu0 0.0
    %78 = vmatpush1.msra.mxu0 0.0
    %79 = vmatprep.subr.mxu0 0.0
    %80 = vmatpush1.msra.mxu0 0.0
    %81 = vmatprep.subr.mxu0 0.0
    %82 = vmatpush1.msra.mxu0 0.0
    %83 = vmatprep.subr.mxu0 0.0
    %84 = vmatpush1.msra.mxu0 0.0
    %85 = vmatprep.subr.mxu0 0.0
    %86 = vmatpush1.msra.mxu0 0.0
    %87 = vmatprep.subr.mxu0 0.0
    %88 = vmatpush1.msra.mxu0 0.0
    %89 = vmatprep.subr.mxu0 0.0
    %90 = vmatpush1.msra.mxu0 0.0
    %91 = vmatprep.subr.mxu0 0.0
    %92 = vmatpush1.msra.mxu0 0.0
    %93 = vmatprep.subr.mxu0 0.0
    %94 = vmatpush1.msra.mxu0 0.0
    %95 = vmatprep.subr.mxu0 0.0
    %96 = vmatpush1.msra.mxu0 0.0
    %97 = vmatprep.subr.mxu0 0.0
    %98 = vmatpush1.msra.mxu0 0.0
    %99 = vmatprep.subr.mxu0 0.0
    %100 = vmatpush1.msra.mxu0 0.0
    %101 = vmatprep.subr.mxu0 0.0
    %102 = vmatpush1.msra.mxu0 0.0
    %103 = vmatprep.subr.mxu0 0.0
    %104 = vmatpush1.msra.mxu0 0.0
    %105 = vmatprep.subr.mxu0 0.0
    %106 = vmatpush1.msra.mxu0 0.0
    %107 = vmatprep.subr.mxu0 0.0
    %108 = vmatpush1.msra.mxu0 0.0
    %109 = vmatprep.subr.mxu0 0.0
    %110 = vmatpush1.msra.mxu0 0.0
    %111 = vmatprep.subr.mxu0 0.0
    %112 = vmatpush1.msra.mxu0 0.0
    %113 = vmatprep.subr.mxu0 0.0
    %114 = vmatpush1.msra.mxu0 0.0
    %115 = vmatprep.subr.mxu0 0.0
    %116 = vmatpush1.msra.mxu0 0.0
    %117 = vmatprep.subr.mxu0 0.0
    %118 = vmatpush1.msra.mxu0 0.0
    %119 = vmatprep.mubr.f32.mxu0 0.0
    %120 = vmatmul.mubr.f32.gmra.mrb[0].mxu0 %v53
    %v121 = vpop.f32.mrb[0].mxu0
    %v122 = vadd.f32 %v49, %v121
    %v123 = vpop.f32.mrb[0].mxu0
    %124 = vdwg.mxu0
    %vm125 = vcmask 261120
    %126 = vst.msk [vmem:[#allocation7] sm:$0xff] %vm125, %v122
    // Predicated region
    $region22: #{tpu_custom_call.1} parent=1 // pred_check
      _
    $region23: #{tpu_custom_call.1} parent=1 // pred_check_branch
      %128 = sbr.rel (0) target = $region25
    $region24: #{tpu_custom_call.1} parent=1 // pred_region
      %s130 = ssub.s32 128, 128
      %131 = vsyncadd [#allocation4], %s130
      %s133 = sshll.u32 [#allocation7], 4
      %s134 = int_to_ptr.vmem [resolvable:$true] %s133
      %136 = dma.vmem_to_hbm [thread:$0]  %s134, 128, %s3, [#allocation4]
    $region25: #{tpu_custom_call.1} parent=1 // pred_fallthru
      _
    // Predicated region
    $region26: #{tpu_custom_call.1} parent=1 // pred_check
      _
    $region27: #{tpu_custom_call.1} parent=1 // pred_check_branch
      %138 = sbr.rel (0) target = $region29
    $region28: #{tpu_custom_call.1} parent=1 // pred_region
      %139 = dma.done [#allocation4], 128
    $region29: #{tpu_custom_call.1} parent=1 // pred_fallthru
      _
    %140 = vsyncpa [#allocation3], 1
    %141 = vsyncpa [#allocation6], 1
    %142 = vsyncpa [#allocation4], 1

</llo_original>
